<compile_context>
chip_gen: v7x
topology: tpu7x:2x2x1
jax: 0.10.0
libtpu: 0.0.40
codegen_flags: <defaults>
</compile_context>

<pallas_src>
import functools
import math

import jax
import jax.numpy as jnp
from jax import lax
from jax.experimental import pallas as pl
from jax.experimental.pallas import tpu as pltpu


def _round_up(x, m):
    return ((x + m - 1) // m) * m


def _vmem_limit(need_bytes, floor=16 << 20, ceil=64 << 20):
    # Explicit scoped-VMEM budget: 2x headroom over the static estimate,
    # clamped to v7x's 64 MiB physical ceiling.
    return int(min(ceil, max(floor, 2 * need_bytes)))


# --------------------------------------------------------------------------
# Stage 1: fused QKV projection over flattened (B*T_pad, C) rows.
# --------------------------------------------------------------------------
def _qkv_proj_kernel(x_ref, w_ref, q_ref, k_ref, v_ref, *, dp):
    # x block: (tproj, C) bf16 ; w block: (C, 3*Dp) bf16 ; outputs: (tproj, Dp)
    qkv = jnp.dot(x_ref[...], w_ref[...], preferred_element_type=jnp.float32)
    q_ref[...] = qkv[:, :dp].astype(q_ref.dtype)          # scale folded in
    k_ref[...] = qkv[:, dp:2 * dp].astype(k_ref.dtype)
    v_ref[...] = qkv[:, 2 * dp:].astype(v_ref.dtype)


# --------------------------------------------------------------------------
# Stage 2: causal flash attention with online softmax.
# --------------------------------------------------------------------------
def _flash_attn_kernel(q_ref, k_ref, v_ref, o_ref, m_ref, l_ref, acc_ref,
                       *, tq, tk):
    qi = pl.program_id(1)
    ki = pl.program_id(2)
    num_kv = pl.num_programs(2)

    @pl.when(ki == 0)
    def _():
        m_ref[...] = jnp.full_like(m_ref, -jnp.inf)
        l_ref[...] = jnp.zeros_like(l_ref)
        acc_ref[...] = jnp.zeros_like(acc_ref)

    q_start = qi * tq
    k_start = ki * tk

    def update(apply_mask):
        q = q_ref[0]                                   # (tq, Dp) bf16, pre-scaled
        k = k_ref[0]                                   # (tk, Dp) bf16
        # Contract on the last dims directly (no explicit k.T -> no XLU
        # transpose / extra K-tile copy).
        s = lax.dot_general(q, k, dimension_numbers=(((1,), (1,)), ((), ())),
                            preferred_element_type=jnp.float32)   # (tq, tk) f32
        if apply_mask:
            # Causal mask.  Zero-padded key rows have global column index >= T,
            # which is > every valid row index, so they are masked by the same
            # predicate; padded query rows are sliced off by the caller.
            row = q_start + lax.broadcasted_iota(jnp.int32, (tq, tk), 0)
            col = k_start + lax.broadcasted_iota(jnp.int32, (tq, tk), 1)
            s = jnp.where(col > row, jnp.float32(-1e30), s)

        m_prev = m_ref[...]                                        # (tq, 1)
        m_new = jnp.maximum(m_prev, jnp.max(s, axis=-1, keepdims=True))
        alpha = jnp.exp(m_prev - m_new)
        p = jnp.exp(s - m_new)                                     # (tq, tk) f32
        l_ref[...] = alpha * l_ref[...] + jnp.sum(p, axis=-1, keepdims=True)
        acc_ref[...] = alpha * acc_ref[...] + jnp.dot(
            p.astype(v_ref.dtype), v_ref[0],
            preferred_element_type=jnp.float32)
        m_ref[...] = m_new

    # Fully-visible tile (entirely at or below the diagonal): skip mask ops.
    @pl.when(k_start + (tk - 1) <= q_start)
    def _():
        update(apply_mask=False)

    # Diagonal-straddling tile: apply the causal / pad-column mask.
    @pl.when(jnp.logical_and(k_start + (tk - 1) > q_start,
                             k_start <= q_start + (tq - 1)))
    def _():
        update(apply_mask=True)

    # Tiles entirely above the diagonal match neither branch (compute skipped);
    # their K/V DMAs are also elided via the clamped index_map in the caller.

    @pl.when(ki == num_kv - 1)
    def _():
        inv_l = pl.reciprocal(l_ref[...], approx=True)             # EUP vrcp
        o_ref[0] = (acc_ref[...] * inv_l).astype(o_ref.dtype)


def causal_attention(x, w_query, w_key, w_value, *, q_tile=256, kv_tile=256):
    """x: (B, T, C) float32.  w_*: (d_out, d_in) PyTorch-Linear layout.

    Default 256x256 seq tiles put the kv loop above the HBM roofline
    crossover on all generations and fill the 256-wide MXU on v6e/v7x while
    staying ~1 MiB of VMEM per step (well under v7x's 64 MiB physical limit;
    vmem_limit_bytes is set explicitly from the tile budget below).
    """
    B, T, C = x.shape
    d_out = w_query.shape[0]
    scale = 1.0 / math.sqrt(d_out)

    # Lane-dense padded head dim (multiple of 128) and 16-aligned seq tiles
    # (bf16 packs 16 rows per vreg sublane group).
    dp = _round_up(d_out, 128)
    tq = min(q_tile, _round_up(T, 16))
    tk = min(kv_tile, _round_up(T, 16))
    t_pad = _round_up(T, math.lcm(tq, tk))

    x_p = x if t_pad == T else jnp.pad(x, ((0, 0), (0, t_pad - T), (0, 0)))
    x_bf = x_p.astype(jnp.bfloat16)

    # PyTorch Linear computes x @ W^T; pre-transpose, pad N to Dp (lane-dense),
    # fold the 1/sqrt(d_out) softmax scale into W_query and fuse all three
    # projections into a single (C, 3*Dp) weight for full MXU width.
    def _prep(w, s=1.0):
        wt = w.astype(jnp.float32).T * s                           # (C, d_out)
        return jnp.pad(wt, ((0, 0), (0, dp - d_out)))

    w_qkv = jnp.concatenate(
        [_prep(w_query, scale), _prep(w_key), _prep(w_value)],
        axis=1).astype(jnp.bfloat16)                               # (C, 3*Dp)

    # --- Stage 1: fused QKV projection (row-flattened, large tiles) ---------
    rows = B * t_pad
    tproj = 16
    for cand in (2048, 1024, 512, 256, 128, 64, 32, 16):
        if rows % cand == 0:
            tproj = cand
            break
    x_flat = x_bf.reshape(rows, C)

    s1_vmem = (2 * tproj * C * 2            # x block, double-buffered bf16
               + 2 * C * 3 * dp * 2         # resident weight (2 bufs worst case)
               + 3 * 2 * tproj * dp * 2)    # q/k/v out blocks, double-buffered
    # NOTE: for very large C*dp the resident weight itself dominates; tile C
    # across a third grid axis (with an f32 accumulator) in that regime.
    q, k, v = pl.pallas_call(
        functools.partial(_qkv_proj_kernel, dp=dp),
        out_shape=[jax.ShapeDtypeStruct((rows, dp), jnp.bfloat16)
                   for _ in range(3)],
        grid_spec=pltpu.PrefetchScalarGridSpec(
            num_scalar_prefetch=0,
            grid=(rows // tproj,),
            in_specs=[
                pl.BlockSpec((tproj, C), lambda t: (t, 0)),
                # constant index_map -> weight tile stays resident in VMEM
                pl.BlockSpec((C, 3 * dp), lambda t: (0, 0)),
            ],
            out_specs=[pl.BlockSpec((tproj, dp), lambda t: (t, 0))
                       for _ in range(3)],
        ),
        compiler_params=pltpu.CompilerParams(
            dimension_semantics=("parallel",),
            vmem_limit_bytes=_vmem_limit(s1_vmem)),
    )(x_flat, w_qkv)

    q = q.reshape(B, t_pad, dp)
    k = k.reshape(B, t_pad, dp)
    v = v.reshape(B, t_pad, dp)

    # --- Stage 2: causal flash attention -----------------------------------
    n_q = t_pad // tq
    n_k = t_pad // tk

    def kv_index_map(b, i, j):
        # Clamp to the last kv block that holds any causally-visible key for
        # this q tile.  For j beyond it the block index repeats, so Pallas
        # elides the DMA -> upper-triangle K/V tiles are never fetched.
        last_needed = (i * tq + (tq - 1)) // tk
        return (b, jnp.minimum(j, last_needed), 0)

    s2_vmem = (2 * tq * dp * 2              # q block, double-buffered bf16
               + 2 * 2 * tk * dp * 2        # k + v blocks, double-buffered bf16
               + 2 * tq * dp * 4            # out block, double-buffered f32
               + tq * dp * 4                # acc scratch f32
               + 2 * tq * 4)                # m, l scratch
    out = pl.pallas_call(
        functools.partial(_flash_attn_kernel, tq=tq, tk=tk),
        out_shape=jax.ShapeDtypeStruct((B, t_pad, dp), jnp.float32),
        grid_spec=pltpu.PrefetchScalarGridSpec(
            num_scalar_prefetch=0,
            grid=(B, n_q, n_k),
            in_specs=[
                pl.BlockSpec((1, tq, dp), lambda b, i, j: (b, i, 0)),
                pl.BlockSpec((1, tk, dp), kv_index_map),
                pl.BlockSpec((1, tk, dp), kv_index_map),
            ],
            out_specs=pl.BlockSpec((1, tq, dp), lambda b, i, j: (b, i, 0)),
            scratch_shapes=[
                pltpu.VMEM((tq, 1), jnp.float32),    # running max m
                pltpu.VMEM((tq, 1), jnp.float32),    # running denom l
                pltpu.VMEM((tq, dp), jnp.float32),   # f32 output accumulator
            ],
        ),
        compiler_params=pltpu.CompilerParams(
            # batch + q-tile axes parallel (megacore/2-TC sharding on v7x),
            # kv reduction axis last and arbitrary.
            dimension_semantics=("parallel", "parallel", "arbitrary"),
            vmem_limit_bytes=_vmem_limit(s2_vmem)),
    )(q, k, v)

    return out[:, :T, :d_out].astype(x.dtype)


def _reference(x, w_query, w_key, w_value):
    # Pure-JAX reference mirroring the PyTorch forward (eval-mode dropout).
    q = x @ w_query.T
    k = x @ w_key.T
    v = x @ w_value.T
    omega = jnp.einsum("btd,bsd->bts", q, k)
    T = x.shape[1]
    mask = jnp.triu(jnp.ones((T, T), dtype=bool), k=1)
    omega = jnp.where(mask[None], -jnp.inf, omega)
    att = jax.nn.softmax(omega / math.sqrt(k.shape[-1]), axis=-1)
    return att @ v


if __name__ == "__main__":
    # Small shapes consistent with the module's forward: x is (B, T, d_in).
    B, T, d_in, d_out, context_len = 2, 8, 32, 32, 16

    key = jax.random.PRNGKey(0)
    kx, kq, kk, kv = jax.random.split(key, 4)

    x = jax.random.normal(kx, (B, T, d_in), dtype=jnp.float32)
    # Deterministic parameter init (PyTorch Linear weight shape: (d_out, d_in)).
    bound = 1.0 / math.sqrt(d_in)
    w_query = jax.random.uniform(kq, (d_out, d_in), jnp.float32, -bound, bound)
    w_key = jax.random.uniform(kk, (d_out, d_in), jnp.float32, -bound, bound)
    w_value = jax.random.uniform(kv, (d_out, d_in), jnp.float32, -bound, bound)

    out = causal_attention(x, w_query, w_key, w_value)
    out = jax.block_until_ready(out)

    ref = _reference(x, w_query, w_key, w_value)
    assert out.shape == (B, T, d_out)
    max_err = float(jnp.max(jnp.abs(out - ref)))
    assert jnp.allclose(out, ref, atol=2e-2, rtol=2e-2), (
        f"mismatch vs reference, max abs err {max_err}")

    print("KERNEL_OK")
</pallas_src>

<mosaic_0001>
module attributes {stable_mosaic.version = 11 : i64} {
  func.func @_qkv_proj_kernel(%arg0: i32, %arg1: memref<32x32xbf16, #tpu.memory_space<vmem>>, %arg2: memref<32x384xbf16, #tpu.memory_space<vmem>>, %arg3: memref<32x128xbf16, #tpu.memory_space<vmem>>, %arg4: memref<32x128xbf16, #tpu.memory_space<vmem>>, %arg5: memref<32x128xbf16, #tpu.memory_space<vmem>>) attributes {dimension_semantics = [#tpu.dimension_semantics<parallel>], iteration_bounds = array<i64: 1>, scalar_prefetch = 0 : i64, scratch_operands = 0 : i64, tpu.core_type = #tpu.core_type<tc>, window_params = [{transform_indices = @transform_0, window_bounds = array<i64: 32, 32>}, {pipeline_mode = #tpu.pipeline_mode<synchronous>, transform_indices = @transform_1, window_bounds = array<i64: 32, 384>}, {transform_indices = @transform_2, window_bounds = array<i64: 32, 128>}, {transform_indices = @transform_3, window_bounds = array<i64: 32, 128>}, {transform_indices = @transform_4, window_bounds = array<i64: 32, 128>}]} {
    %c0 = arith.constant 0 : index
    %c0_0 = arith.constant 0 : index
    %0 = vector.load %arg1[%c0, %c0_0] : memref<32x32xbf16, #tpu.memory_space<vmem>>, vector<32x32xbf16>
    %c0_1 = arith.constant 0 : index
    %c0_2 = arith.constant 0 : index
    %1 = vector.load %arg2[%c0_1, %c0_2] : memref<32x384xbf16, #tpu.memory_space<vmem>>, vector<32x384xbf16>
    %cst = arith.constant dense<0.000000e+00> : vector<32x384xf32>
    %2 = tpu.matmul %0, %1, %cst {dimension_numbers = #tpu.dot_dimension_numbers<[1], [0], [0], [1], [0, 0, 1, 1], [], []>} : vector<32x32xbf16>, vector<32x384xbf16>, vector<32x384xf32> -> vector<32x384xf32>
    %3 = vector.extract_strided_slice %2 {offsets = [0, 0], sizes = [32, 128], strides = [1, 1]} : vector<32x384xf32> to vector<32x128xf32>
    %4 = arith.truncf %3 : vector<32x128xf32> to vector<32x128xbf16>
    %c0_3 = arith.constant 0 : index
    %c0_4 = arith.constant 0 : index
    %5 = vector.load %arg3[%c0_3, %c0_4] : memref<32x128xbf16, #tpu.memory_space<vmem>>, vector<32x128xbf16>
    tpu.vector_store %arg3[%c0_3, %c0_4], %4 {strides = array<i32>} : memref<32x128xbf16, #tpu.memory_space<vmem>>, vector<32x128xbf16>,
    %6 = vector.extract_strided_slice %2 {offsets = [0, 128], sizes = [32, 128], strides = [1, 1]} : vector<32x384xf32> to vector<32x128xf32>
    %7 = arith.truncf %6 : vector<32x128xf32> to vector<32x128xbf16>
    %c0_5 = arith.constant 0 : index
    %c0_6 = arith.constant 0 : index
    %8 = vector.load %arg4[%c0_5, %c0_6] : memref<32x128xbf16, #tpu.memory_space<vmem>>, vector<32x128xbf16>
    tpu.vector_store %arg4[%c0_5, %c0_6], %7 {strides = array<i32>} : memref<32x128xbf16, #tpu.memory_space<vmem>>, vector<32x128xbf16>,
    %9 = vector.extract_strided_slice %2 {offsets = [0, 256], sizes = [32, 128], strides = [1, 1]} : vector<32x384xf32> to vector<32x128xf32>
    %10 = arith.truncf %9 : vector<32x128xf32> to vector<32x128xbf16>
    %c0_7 = arith.constant 0 : index
    %c0_8 = arith.constant 0 : index
    %11 = vector.load %arg5[%c0_7, %c0_8] : memref<32x128xbf16, #tpu.memory_space<vmem>>, vector<32x128xbf16>
    tpu.vector_store %arg5[%c0_7, %c0_8], %10 {strides = array<i32>} : memref<32x128xbf16, #tpu.memory_space<vmem>>, vector<32x128xbf16>,
    return
  }
  func.func @transform_0(%arg0: i32) -> (i32, i32) {
    %c0_i32 = arith.constant 0 : i32
    %c0_i32_0 = arith.constant 0 : i32
    return %arg0, %c0_i32 : i32, i32
  }
  func.func @transform_1(%arg0: i32) -> (i32, i32) {
    %c0_i32 = arith.constant 0 : i32
    %c0_i32_0 = arith.constant 0 : i32
    %c0_i32_1 = arith.constant 0 : i32
    return %c0_i32, %c0_i32_0 : i32, i32
  }
  func.func @transform_2(%arg0: i32) -> (i32, i32) {
    %c0_i32 = arith.constant 0 : i32
    %c0_i32_0 = arith.constant 0 : i32
    return %arg0, %c0_i32 : i32, i32
  }
  func.func @transform_3(%arg0: i32) -> (i32, i32) {
    %c0_i32 = arith.constant 0 : i32
    %c0_i32_0 = arith.constant 0 : i32
    return %arg0, %c0_i32 : i32, i32
  }
  func.func @transform_4(%arg0: i32) -> (i32, i32) {
    %c0_i32 = arith.constant 0 : i32
    %c0_i32_0 = arith.constant 0 : i32
    return %arg0, %c0_i32 : i32, i32
  }
}

</mosaic_0001>

<llo_original>
// kernel: tpu_custom_call.1
$region0: #{tpu_custom_call.1}
  #allocation0 [shape = 'u32[]', space=smem, size = 0x4, offset = 0x4, fixed_abs, tag = 'smem constant byte address 0x4 - core index']
  #allocation1 [shape = 'u32[144,128]{1,0:T(1,128)}', space=vmem, size = 0x12000, scoped, tag = 'internal scratch']
  %s0 = inlined_call_operand.hbm [shape: bf16[32,32], index: 0, kind: input, shape index: {}]
  %s1 = inlined_call_operand.hbm [shape: bf16[32,384], index: 1, kind: input, shape index: {}]
  %s2 = inlined_call_operand.hbm [shape: bf16[32,128], index: 2, kind: output, shape index: {0}]
  %s3 = inlined_call_operand.hbm [shape: bf16[32,128], index: 3, kind: output, shape index: {1}]
  %s4 = inlined_call_operand.hbm [shape: bf16[32,128], index: 4, kind: output, shape index: {2}]
  %5 = xla_tuple %s2, %s3, %s4
  %s6 = sld [smem:[#allocation0]]
  $region42: #{tpu_custom_call.1} parent=0
    _
  %s8 = ssub.s32 1, %s6
  %s9 = scalar_select 0, %s8, %s6
  $region1: #{tpu_custom_call.1} parent=0
    #allocation2 [shape = 'u8[8192]{0}', space=vmem, size = 0x2000, scoped, tag = 'input window, operand 0, single buffered']
    #allocation3 [shape = 's32[1]{0}', space=sflag, size = 0x4, scoped, tag = 'scoped memory for tpu_custom_call.1']
    #allocation4 [shape = 's32[1]{0}', space=sflag, size = 0x4, scoped, tag = 'scoped memory for tpu_custom_call.1']
    #allocation5 [shape = 'u8[24576]{0}', space=vmem, size = 0x6000, scoped, tag = 'input window, operand 1, single buffered']
    #allocation6 [shape = 's32[1]{0}', space=sflag, size = 0x4, scoped, tag = 'scoped memory for tpu_custom_call.1']
    #allocation7 [shape = 'u8[8192]{0}', space=vmem, size = 0x2000, scoped, tag = 'output window, operand 0, single buffered']
    #allocation8 [shape = 'u8[8192]{0}', space=vmem, size = 0x2000, scoped, tag = 'output window, operand 1, single buffered']
    #allocation9 [shape = 's32[1]{0}', space=sflag, size = 0x4, scoped, tag = 'scoped memory for tpu_custom_call.1']
    #allocation10 [shape = 'u8[8192]{0}', space=vmem, size = 0x2000, scoped, tag = 'output window, operand 2, single buffered']
    %10 = vsyncpa [#allocation3], 0
    %11 = vsyncpa [#allocation6], 0
    %12 = vsyncpa [#allocation4], 0
    %13 = vsyncpa [#allocation9], 0
    // Predicated region
    $region2: #{tpu_custom_call.1} parent=1 // pred_check
      _
    $region3: #{tpu_custom_call.1} parent=1 // pred_check_branch
      %15 = sbr.rel (0) target = $region5
    $region4: #{tpu_custom_call.1} parent=1 // pred_region
      %s17 = ssub.s32 256, 256
      %18 = vsyncadd [#allocation3], %s17
      %s19 = sshll.u32 [#allocation2], 4
      %s20 = int_to_ptr.vmem [resolvable:$true] %s19
      %25 = dma.hbm_to_vmem [thread:$0]  %s0, 256, %s20, [#allocation3], 64, 64, 4
    $region5: #{tpu_custom_call.1} parent=1 // pred_fallthru
      _
    // Predicated region
    $region6: #{tpu_custom_call.1} parent=1 // pred_check
      _
    $region7: #{tpu_custom_call.1} parent=1 // pred_check_branch
      %27 = sbr.rel (0) target = $region9
    $region8: #{tpu_custom_call.1} parent=1 // pred_region
      %s29 = ssub.s32 768, 768
      %30 = vsyncadd [#allocation6], %s29
      %s31 = sshll.u32 [#allocation5], 4
      %s32 = int_to_ptr.vmem [resolvable:$true] %s31
      %37 = dma.hbm_to_vmem [thread:$0]  %s1, 768, %s32, [#allocation6], 192, 192, 12
    $region9: #{tpu_custom_call.1} parent=1 // pred_fallthru
      _
    // Predicated region
    $region10: #{tpu_custom_call.1} parent=1 // pred_check
      _
    $region11: #{tpu_custom_call.1} parent=1 // pred_check_branch
      %39 = sbr.rel (0) target = $region13
    $region12: #{tpu_custom_call.1} parent=1 // pred_region
      %40 = dma.done [#allocation3], 256
    $region13: #{tpu_custom_call.1} parent=1 // pred_fallthru
      _
    // Predicated region
    $region14: #{tpu_custom_call.1} parent=1 // pred_check
      _
    $region15: #{tpu_custom_call.1} parent=1 // pred_check_branch
      %42 = sbr.rel (0) target = $region17
    $region16: #{tpu_custom_call.1} parent=1 // pred_region
      %43 = dma.done [#allocation6], 768
    $region17: #{tpu_custom_call.1} parent=1 // pred_fallthru
      _
    %v45 = vld [vmem:[#allocation2] sm:$0xf]
    %v46 = vld [vmem:[#allocation2 + $0x4] sm:$0xf]
    %v47 = vld [vmem:[#allocation2 + $0x8] sm:$0xf]
    %v48 = vld [vmem:[#allocation2 + $0xc] sm:$0xf]
    %v49 = vld [vmem:[#allocation5] sm:$0xff]
    %v50 = vld [vmem:[#allocation5 + $0x8] sm:$0xf]
    %v51 = vld [vmem:[#allocation5 + $0xc] sm:$0xff]
    %v52 = vld [vmem:[#allocation5 + $0x14] sm:$0xf]
    %v53 = vld [vmem:[#allocation5 + $0x18] sm:$0xff]
    %v54 = vld [vmem:[#allocation5 + $0x20] sm:$0xf]
    %v55 = vld [vmem:[#allocation5 + $0x24] sm:$0xff]
    %v56 = vld [vmem:[#allocation5 + $0x2c] sm:$0xf]
    %v61 = vunpack.c.l.b16 %v45
    %v62 = vunpack.c.l.b16 %v46
    %v63 = vunpack.c.l.b16 %v47
    %v64 = vunpack.c.l.b16 %v48
    %v65 = vpack.c.b16 %v62, %v61
    %v66 = vpack.c.b16 %v64, %v63
    %v75 = vunpack.c.l.b16 %v49
    %v76 = vunpack.c.h.b16 %v49
    %v77 = vunpack.c.l.b16 %v50
    %v78 = vunpack.c.l.b16 %v51
    %v79 = vunpack.c.h.b16 %v51
    %v80 = vunpack.c.l.b16 %v52
    %v81 = vunpack.c.l.b16 %v53
    %v82 = vunpack.c.h.b16 %v53
    %v83 = vunpack.c.l.b16 %v54
    %v84 = vunpack.c.l.b16 %v55
    %v85 = vunpack.c.h.b16 %v55
    %v86 = vunpack.c.l.b16 %v56
    %v87 = vpack.c.b16 %v78, %v75
    %v88 = vpack.c.b16 %v79, %v76
    %v89 = vpack.c.b16 %v80, %v77
    %v90 = vpack.c.b16 %v84, %v81
    %v91 = vpack.c.b16 %v85, %v82
    %v92 = vpack.c.b16 %v86, %v83
    %vm99 = vcmask 261120
    %v101 = vsel %vm99, %v65, 0
    %v104 = vsel %vm99, %v66, 0
    %106 = vmatprep.subr.bf16.mxu0 %v88
    %107 = vmatpush1.bf16.msra.mxu0 %v87
    %108 = vmatprep.subr.bf16.mxu0 %v91
    %109 = vmatpush1.bf16.msra.mxu0 %v90
    %110 = vmatprep.subr.bf16.mxu0 0
    %111 = vmatpush1.bf16.msra.mxu0 0
    %112 = vmatprep.subr.bf16.mxu0 0
    %113 = vmatpush1.bf16.msra.mxu0 0
    %114 = vmatprep.subr.bf16.mxu0 0
    %115 = vmatpush1.bf16.msra.mxu0 0
    %116 = vmatprep.subr.bf16.mxu0 0
    %117 = vmatpush1.bf16.msra.mxu0 0
    %118 = vmatprep.subr.bf16.mxu0 0
    %119 = vmatpush1.bf16.msra.mxu0 0
    %120 = vmatprep.subr.bf16.mxu0 0
    %121 = vmatpush1.bf16.msra.mxu0 0
    %122 = vmatprep.subr.bf16.mxu0 0
    %123 = vmatpush1.bf16.msra.mxu0 0
    %124 = vmatprep.subr.bf16.mxu0 0
    %125 = vmatpush1.bf16.msra.mxu0 0
    %126 = vmatprep.subr.bf16.mxu0 0
    %127 = vmatpush1.bf16.msra.mxu0 0
    %128 = vmatprep.subr.bf16.mxu0 0
    %129 = vmatpush1.bf16.msra.mxu0 0
    %130 = vmatprep.subr.bf16.mxu0 0
    %131 = vmatpush1.bf16.msra.mxu0 0
    %132 = vmatprep.subr.bf16.mxu0 0
    %133 = vmatpush1.bf16.msra.mxu0 0
    %134 = vmatprep.subr.bf16.mxu0 0
    %135 = vmatpush1.bf16.msra.mxu0 0
    %136 = vmatprep.subr.bf16.mxu0 0
    %137 = vmatpush1.bf16.msra.mxu0 0
    %138 = vmatprep.mubr.bf16.mxu0 0
    %139 = vmatmul.mubr.bf16.gmra.mrb[0].mxu0 %v101
    %v140 = vpop.f32.mrb[0].mxu0
    %v141 = vadd.f32 0.0, %v140
    %v142 = vpop.f32.mrb[0].mxu0
    %v143 = vadd.f32 0.0, %v142
    %v144 = vpop.f32.mrb[0].mxu0
    %v145 = vadd.f32 0.0, %v144
    %v146 = vpop.f32.mrb[0].mxu0
    %v147 = vadd.f32 0.0, %v146
    %148 = vmatprep.mubr.bf16.mxu0 0
    %149 = vmatmul.mubr.bf16.gmra.mrb[0].mxu0 %v104
    %v150 = vpop.f32.mrb[0].mxu0
    %v151 = vadd.f32 0.0, %v150
    %v152 = vpop.f32.mrb[0].mxu0
    %v153 = vadd.f32 0.0, %v152
    %v154 = vpop.f32.mrb[0].mxu0
    %v155 = vadd.f32 0.0, %v154
    %v156 = vpop.f32.mrb[0].mxu0
    %v157 = vadd.f32 0.0, %v156
    %158 = vdwg.mxu0
    %159 = vmatprep.subr.bf16.mxu0 0
    %160 = vmatpush1.bf16.msra.mxu0 %v89
    %161 = vmatprep.subr.bf16.mxu0 0
    %162 = vmatpush1.bf16.msra.mxu0 %v92
    %163 = vmatprep.subr.bf16.mxu0 0
    %164 = vmatpush1.bf16.msra.mxu0 0
    %165 = vmatprep.subr.bf16.mxu0 0
    %166 = vmatpush1.bf16.msra.mxu0 0
    %167 = vmatprep.subr.bf16.mxu0 0
    %168 = vmatpush1.bf16.msra.mxu0 0
    %169 = vmatprep.subr.bf16.mxu0 0
    %170 = vmatpush1.bf16.msra.mxu0 0
    %171 = vmatprep.subr.bf16.mxu0 0
    %172 = vmatpush1.bf16.msra.mxu0 0
    %173 = vmatprep.subr.bf16.mxu0 0
    %174 = vmatpush1.bf16.msra.mxu0 0
    %175 = vmatprep.subr.bf16.mxu0 0
    %176 = vmatpush1.bf16.msra.mxu0 0
    %177 = vmatprep.subr.bf16.mxu0 0
    %178 = vmatpush1.bf16.msra.mxu0 0
    %179 = vmatprep.subr.bf16.mxu0 0
    %180 = vmatpush1.bf16.msra.mxu0 0
    %181 = vmatprep.subr.bf16.mxu0 0
    %182 = vmatpush1.bf16.msra.mxu0 0
    %183 = vmatprep.subr.bf16.mxu0 0
    %184 = vmatpush1.bf16.msra.mxu0 0
    %185 = vmatprep.subr.bf16.mxu0 0
    %186 = vmatpush1.bf16.msra.mxu0 0
    %187 = vmatprep.subr.bf16.mxu0 0
    %188 = vmatpush1.bf16.msra.mxu0 0
    %189 = vmatprep.subr.bf16.mxu0 0
    %190 = vmatpush1.bf16.msra.mxu0 0
    %191 = vmatprep.mubr.bf16.mxu0 0
    %192 = vmatmul.mubr.bf16.gmra.mrb[0].mxu0 %v101
    %v193 = vpop.f32.mrb[0].mxu0
    %v194 = vadd.f32 0.0, %v193
    %v195 = vpop.f32.mrb[0].mxu0
    %v196 = vpop.f32.mrb[0].mxu0
    %v197 = vadd.f32 0.0, %v196
    %v198 = vpop.f32.mrb[0].mxu0
    %199 = vmatprep.mubr.bf16.mxu0 0
    %200 = vmatmul.mubr.bf16.gmra.mrb[0].mxu0 %v104
    %v201 = vpop.f32.mrb[0].mxu0
    %v202 = vadd.f32 0.0, %v201
    %v203 = vpop.f32.mrb[0].mxu0
    %v204 = vpop.f32.mrb[0].mxu0
    %v205 = vadd.f32 0.0, %v204
    %v206 = vpop.f32.mrb[0].mxu0
    %207 = vdwg.mxu0
    %v208 = vpack.c.bf16 %v145, %v141
    %v209 = vpack.c.bf16 %v155, %v151
    %v212 = vunpack.c.l.b16 %v208
    %v213 = vunpack.c.h.b16 %v208
    %v214 = vunpack.c.l.b16 %v209
    %v215 = vunpack.c.h.b16 %v209
    %v216 = vpack.c.b16 %v212, %v212
    %v217 = vpack.c.b16 %v213, %v213
    %v218 = vpack.c.b16 %v214, %v214
    %v219 = vpack.c.b16 %v215, %v215
    %224 = vst [vmem:[#allocation7] sm:$0xf] %v216
    %225 = vst [vmem:[#allocation7 + $0x4] sm:$0xf] %v217
    %226 = vst [vmem:[#allocation7 + $0x8] sm:$0xf] %v218
    %227 = vst [vmem:[#allocation7 + $0xc] sm:$0xf] %v219
    %v228 = vpack.c.bf16 %v147, %v143
    %v229 = vpack.c.bf16 %v157, %v153
    %v232 = vunpack.c.l.b16 %v228
    %v233 = vunpack.c.h.b16 %v228
    %v234 = vunpack.c.l.b16 %v229
    %v235 = vunpack.c.h.b16 %v229
    %v236 = vpack.c.b16 %v232, %v232
    %v237 = vpack.c.b16 %v233, %v233
    %v238 = vpack.c.b16 %v234, %v234
    %v239 = vpack.c.b16 %v235, %v235
    %244 = vst [vmem:[#allocation8] sm:$0xf] %v236
    %245 = vst [vmem:[#allocation8 + $0x4] sm:$0xf] %v237
    %246 = vst [vmem:[#allocation8 + $0x8] sm:$0xf] %v238
    %247 = vst [vmem:[#allocation8 + $0xc] sm:$0xf] %v239
    %v248 = vpack.c.bf16 %v197, %v194
    %v249 = vpack.c.bf16 %v205, %v202
    %v252 = vunpack.c.l.b16 %v248
    %v253 = vunpack.c.h.b16 %v248
    %v254 = vunpack.c.l.b16 %v249
    %v255 = vunpack.c.h.b16 %v249
    %v256 = vpack.c.b16 %v252, %v252
    %v257 = vpack.c.b16 %v253, %v253
    %v258 = vpack.c.b16 %v254, %v254
    %v259 = vpack.c.b16 %v255, %v255
    %264 = vst [vmem:[#allocation10] sm:$0xf] %v256
    %265 = vst [vmem:[#allocation10 + $0x4] sm:$0xf] %v257
    %266 = vst [vmem:[#allocation10 + $0x8] sm:$0xf] %v258
    %267 = vst [vmem:[#allocation10 + $0xc] sm:$0xf] %v259
    // Predicated region
    $region18: #{tpu_custom_call.1} parent=1 // pred_check
      _
    $region19: #{tpu_custom_call.1} parent=1 // pred_check_branch
      %269 = sbr.rel (0) target = $region21
    $region20: #{tpu_custom_call.1} parent=1 // pred_region
      %s271 = ssub.s32 256, 256
      %272 = vsyncadd [#allocation4], %s271
      %s273 = sshll.u32 [#allocation7], 4
      %s274 = int_to_ptr.vmem [resolvable:$true] %s273
      %279 = dma.vmem_to_hbm [thread:$0]  %s274, 256, %s2, [#allocation4], 64, 64, 4
    $region21: #{tpu_custom_call.1} parent=1 // pred_fallthru
      _
    // Predicated region
    $region22: #{tpu_custom_call.1} parent=1 // pred_check
      _
    $region23: #{tpu_custom_call.1} parent=1 // pred_check_branch
      %281 = sbr.rel (0) target = $region25
    $region24: #{tpu_custom_call.1} parent=1 // pred_region
      %s283 = ssub.s32 256, 256
      %284 = vsyncadd [#allocation9], %s283
      %s285 = sshll.u32 [#allocation8], 4
      %s286 = int_to_ptr.vmem [resolvable:$true] %s285
      %291 = dma.vmem_to_hbm [thread:$0]  %s286, 256, %s3, [#allocation9], 64, 64, 4
    $region25: #{tpu_custom_call.1} parent=1 // pred_fallthru
      _
    // Predicated region
    $region26: #{tpu_custom_call.1} parent=1 // pred_check
      _
    $region27: #{tpu_custom_call.1} parent=1 // pred_check_branch
      %293 = sbr.rel (0) target = $region29
    $region28: #{tpu_custom_call.1} parent=1 // pred_region
      %s295 = ssub.s32 256, 256
      %296 = vsyncadd [#allocation9], %s295
      %s297 = sshll.u32 [#allocation10], 4
      %s298 = int_to_ptr.vmem [resolvable:$true] %s297
      %303 = dma.vmem_to_hbm [thread:$0]  %s298, 256, %s4, [#allocation9], 64, 64, 4
    $region29: #{tpu_custom_call.1} parent=1 // pred_fallthru
      _
    // Predicated region
    $region30: #{tpu_custom_call.1} parent=1 // pred_check
      _
    $region31: #{tpu_custom_call.1} parent=1 // pred_check_branch
      %305 = sbr.rel (0) target = $region33
    $region32: #{tpu_custom_call.1} parent=1 // pred_region
      %306 = dma.done [#allocation4], 256
    $region33: #{tpu_custom_call.1} parent=1 // pred_fallthru
      _
    // Predicated region
    $region34: #{tpu_custom_call.1} parent=1 // pred_check
      _
    $region35: #{tpu_custom_call.1} parent=1 // pred_check_branch
      %308 = sbr.rel (0) target = $region37
    $region36: #{tpu_custom_call.1} parent=1 // pred_region
      %309 = dma.done [#allocation9], 256
    $region37: #{tpu_custom_call.1} parent=1 // pred_fallthru
      _
    // Predicated region
    $region38: #{tpu_custom_call.1} parent=1 // pred_check
      _
    $region39: #{tpu_custom_call.1} parent=1 // pred_check_branch
      %311 = sbr.rel (0) target = $region41
    $region40: #{tpu_custom_call.1} parent=1 // pred_region
      %312 = dma.done [#allocation9], 256
    $region41: #{tpu_custom_call.1} parent=1 // pred_fallthru
      _
    %313 = vsyncpa [#allocation3], 1
    %314 = vsyncpa [#allocation6], 1
    %315 = vsyncpa [#allocation4], 1
    %316 = vsyncpa [#allocation9], 1

</llo_original>
